<compile_context>
chip_gen: v6e
topology: v6e:2x2x1
jax: 0.10.0
libtpu: 0.0.40
codegen_flags: <defaults>
</compile_context>

<pallas_src>
import functools
import numpy as np
import jax
import jax.numpy as jnp
from jax import lax
from jax.experimental import pallas as pl
from jax.experimental.pallas import tpu as pltpu

EPS = 1e-6  # nn.LayerNorm(d_model, eps=1e-6)

_PARALLEL1 = pltpu.CompilerParams(dimension_semantics=("parallel",))
_PAR_ARB = pltpu.CompilerParams(dimension_semantics=("parallel", "arbitrary"))


# ----------------------------- helpers -----------------------------

def _tile(n, target=512):
    """Largest tile <= target that divides n (full n if none divides).
    Test shapes divide cleanly; for awkward production sizes prefer
    cdiv + padding/masking instead of a full-size fallback block."""
    if n <= target:
        return n
    for t in (target, 256, 128, 64, 32, 16, 8):
        if t <= target and n % t == 0:
            return t
    return n


def _ln(y, g, b):
    mu = jnp.mean(y, axis=-1, keepdims=True)
    var = jnp.mean(jnp.square(y - mu), axis=-1, keepdims=True)
    return (y - mu) * lax.rsqrt(var + EPS) * g + b


# ----------------------------- kernel bodies -----------------------------

def _embed_ln_kernel(emb_ref, pos_ref, g_ref, b_ref, o_ref, *, scale):
    # (optional sqrt(d_model) scale) + positional add + LayerNorm, fused
    y = emb_ref[...] * scale + pos_ref[...]
    o_ref[...] = _ln(y, g_ref[...], b_ref[...])


def _attn_kernel(*refs, scale, causal, self_kv):
    """One (batch, head) grid step of a full MultiHeadAttention sub-layer:
    q/k/v projection -> scores -> softmax -> context -> out-projection
    accumulated over heads -> (+residual, LayerNorm) on the last head."""
    if self_kv:
        (x_ref, wq_ref, wk_ref, wv_ref, wo_ref,
         g_ref, b_ref, pad_ref, o_ref, acc_ref) = refs
    else:
        (x_ref, kv_ref, wq_ref, wk_ref, wv_ref, wo_ref,
         g_ref, b_ref, pad_ref, o_ref, acc_ref) = refs

    h = pl.program_id(1)

    x_f32 = x_ref[...]                                   # (Lq, D) f32 residual / query src
    xb = x_f32.astype(jnp.bfloat16)
    kvb = xb if self_kv else kv_ref[...].astype(jnp.bfloat16)   # (Lk, D) bf16

    # per-head projections; scale folded into q (not the LqxLk score matrix)
    q = jnp.dot(xb, wq_ref[...], preferred_element_type=jnp.float32) * scale
    k = jnp.dot(kvb, wk_ref[...], preferred_element_type=jnp.float32)
    v = jnp.dot(kvb, wv_ref[...], preferred_element_type=jnp.float32)

    # scores: contract last dims (no explicit transpose of k)
    s = lax.dot_general(q.astype(jnp.bfloat16), k.astype(jnp.bfloat16),
                        (((1,), (1,)), ((), ())),
                        preferred_element_type=jnp.float32)      # (Lq, Lk) f32
    s = s + pad_ref[...]                                  # (1, Lk) key-pad bias
    if causal:
        lq, lk = s.shape
        row = lax.broadcasted_iota(jnp.int32, (lq, lk), 0)
        col = lax.broadcasted_iota(jnp.int32, (lq, lk), 1)
        s = jnp.where(col <= row, s, -1e9)                # in-kernel causal mask

    s = s - jnp.max(s, axis=-1, keepdims=True)
    p = jnp.exp(s)
    p = p * pl.reciprocal(jnp.sum(p, axis=-1, keepdims=True), approx=True)

    ctx = jnp.dot(p.astype(jnp.bfloat16), v.astype(jnp.bfloat16),
                  preferred_element_type=jnp.float32)            # (Lq, dv)
    contrib = jnp.dot(ctx.astype(jnp.bfloat16), wo_ref[...],
                      preferred_element_type=jnp.float32)        # (Lq, D)

    @pl.when(h == 0)
    def _():
        acc_ref[...] = x_f32                              # residual seeds the acc

    acc_ref[...] += contrib

    @pl.when(h == pl.num_programs(1) - 1)
    def _():
        o_ref[...] = _ln(acc_ref[...], g_ref[...], b_ref[...])


def _ffn_kernel(x_ref, w1_ref, b1_ref, w2_ref, b2_ref, g_ref, be_ref,
                o_ref, acc_ref):
    # PositionwiseFeedForward: relu(x W1 + b1) W2 + b2 + residual, LayerNorm.
    # d_inner is tiled over grid axis 1 and accumulated in f32 VMEM scratch.
    j = pl.program_id(1)
    x = x_ref[...]                                               # (tm, D) f32
    hdn = jnp.dot(x.astype(jnp.bfloat16), w1_ref[...],
                  preferred_element_type=jnp.float32) + b1_ref[...]
    hdn = jnp.maximum(hdn, 0.0)
    part = jnp.dot(hdn.astype(jnp.bfloat16), w2_ref[...],
                   preferred_element_type=jnp.float32)           # (tm, D)

    @pl.when(j == 0)
    def _():
        acc_ref[...] = x + b2_ref[...]        # residual + output bias, added once

    acc_ref[...] += part

    @pl.when(j == pl.num_programs(1) - 1)
    def _():
        o_ref[...] = _ln(acc_ref[...], g_ref[...], be_ref[...])


# ----------------------------- pallas_call wrappers -----------------------------

def embed_add_ln(emb, pos, gamma, beta, *, scale):
    B, L, D = emb.shape
    return pl.pallas_call(
        functools.partial(_embed_ln_kernel, scale=scale),
        grid=(B,),
        in_specs=[pl.BlockSpec((None, L, D), lambda b: (b, 0, 0)),
                  pl.BlockSpec((None, L, D), lambda b: (0, 0, 0)),
                  pl.BlockSpec((1, D), lambda b: (0, 0)),
                  pl.BlockSpec((1, D), lambda b: (0, 0))],
        out_specs=pl.BlockSpec((None, L, D), lambda b: (b, 0, 0)),
        out_shape=jax.ShapeDtypeStruct((B, L, D), jnp.float32),
        compiler_params=_PARALLEL1,
    )(emb, pos, gamma, beta)


def fused_attention(x, kv, w, pad_bias, *, causal, d_k):
    """Fused attention sub-layer:
       out = LayerNorm(x + concat_h(softmax(q_h k_h^T/sqrt(d_k) + mask) v_h) Wo)
    x: (B, Lq, D) f32 query/residual stream.
    kv: (B, Lk, D) f32 key/value source, or None => self-attention (kv = x).
    w: dict with per-head weights wq/wk (H, D, d_k), wv (H, D, d_v),
       wo (H, d_v, D) in bf16, and ln_g/ln_b (1, D) f32.
    pad_bias: (B, 1, Lk) f32 additive key-padding bias (0 keep / -1e9 masked).
    """
    B, Lq, D = x.shape
    H, _, dk = w["wq"].shape
    dv = w["wv"].shape[2]
    self_kv = kv is None
    Lk = Lq if self_kv else kv.shape[1]

    kern = functools.partial(_attn_kernel, scale=1.0 / float(d_k) ** 0.5,
                             causal=causal, self_kv=self_kv)

    in_specs = [pl.BlockSpec((None, Lq, D), lambda b, h: (b, 0, 0))]   # x
    args = [x]
    if not self_kv:
        in_specs.append(pl.BlockSpec((None, Lk, D), lambda b, h: (b, 0, 0)))
        args.append(kv)
    in_specs += [
        pl.BlockSpec((None, D, dk), lambda b, h: (h, 0, 0)),   # wq (this head)
        pl.BlockSpec((None, D, dk), lambda b, h: (h, 0, 0)),   # wk
        pl.BlockSpec((None, D, dv), lambda b, h: (h, 0, 0)),   # wv
        pl.BlockSpec((None, dv, D), lambda b, h: (h, 0, 0)),   # wo (this head)
        pl.BlockSpec((1, D), lambda b, h: (0, 0)),             # ln gamma
        pl.BlockSpec((1, D), lambda b, h: (0, 0)),             # ln beta
        pl.BlockSpec((None, 1, Lk), lambda b, h: (b, 0, 0)),   # key-pad bias
    ]
    args += [w["wq"], w["wk"], w["wv"], w["wo"], w["ln_g"], w["ln_b"], pad_bias]

    # TODO(synk): for long sequences add q-tile / kv-tile grid axes with an
    # online-softmax (flash) loop so scores and K/V stay VMEM-bounded on v7x;
    # also single-buffer constant-index blocks + explicit vmem_limit_bytes.
    return pl.pallas_call(
        kern,
        grid=(B, H),                       # x/enc blocks constant over h -> fetched once per b
        in_specs=in_specs,
        out_specs=pl.BlockSpec((None, Lq, D), lambda b, h: (b, 0, 0)),
        out_shape=jax.ShapeDtypeStruct((B, Lq, D), jnp.float32),
        scratch_shapes=[pltpu.VMEM((Lq, D), jnp.float32)],
        compiler_params=_PAR_ARB,
    )(*args)


def ffn(x, w1, b1, w2, b2, gamma, beta):
    M, D = x.shape
    Di = w1.shape[1]
    tm = _tile(M, 512)      # 512-row tiles ~85% of HBM roofline on v6e
    tdi = _tile(Di, 512)    # bound resident w1/w2 blocks (v5e 16 MiB scoped VMEM)
    # TODO(synk): at very large d_model also tile D of the first matmul, and
    # set an explicit vmem_limit_bytes sized from the actual tiles (v7x).
    return pl.pallas_call(
        _ffn_kernel,
        grid=(M // tm, Di // tdi),
        in_specs=[pl.BlockSpec((tm, D), lambda i, j: (i, 0)),
                  pl.BlockSpec((D, tdi), lambda i, j: (0, j)),
                  pl.BlockSpec((1, tdi), lambda i, j: (0, j)),
                  pl.BlockSpec((tdi, D), lambda i, j: (j, 0)),
                  pl.BlockSpec((1, D), lambda i, j: (0, 0)),
                  pl.BlockSpec((1, D), lambda i, j: (0, 0)),
                  pl.BlockSpec((1, D), lambda i, j: (0, 0))],
        out_specs=pl.BlockSpec((tm, D), lambda i, j: (i, 0)),
        out_shape=jax.ShapeDtypeStruct((M, D), jnp.float32),
        scratch_shapes=[pltpu.VMEM((tm, D), jnp.float32)],
        compiler_params=_PAR_ARB,
    )(x, w1, b1, w2, b2, gamma, beta)


# ----------------------------- model glue -----------------------------

def sinusoid_table(n_position, d_hid):
    pos = np.arange(n_position)[:, None].astype(np.float64)
    hid = np.arange(d_hid)[None, :]
    angle = pos / np.power(10000, 2 * (hid // 2) / d_hid)
    table = np.zeros((n_position, d_hid), dtype=np.float64)
    table[:, 0::2] = np.sin(angle[:, 0::2])
    table[:, 1::2] = np.cos(angle[:, 1::2])
    return jnp.asarray(table[None], dtype=jnp.float32)  # (1, n_position, d_hid)


def _key_pad_bias(mask):
    """{0,1}/bool mask (B,Lq,Lk) or (B,1,Lk) -> additive f32 (B,1,Lk)
    key-padding bias (0 keep / -1e9 masked key)."""
    m = mask
    if m.ndim == 4:
        m = m[:, 0]
    key_keep = jnp.any(m != 0, axis=1)                       # (B, Lk)
    return jnp.where(key_keep, 0.0, -1e9).astype(jnp.float32)[:, None, :]


def decoder_forward(params, trg_seq, trg_mask, enc_output, src_mask,
                    *, n_head, d_k, d_v, scale_emb=False):
    del n_head, d_v  # implied by the per-head weight shapes
    B, L = trg_seq.shape
    D = params["emb"].shape[1]

    # embedding lookup (gather) stays as XLA glue; everything after is Pallas
    emb = jnp.take(params["emb"], trg_seq, axis=0)           # (B, L, D)
    pos = params["pos_table"][:, :L]                         # (1, L, D)
    # dropout == identity (inference); scale + pos-add + LayerNorm fused
    x = embed_add_ln(emb, pos, params["ln_g"], params["ln_b"],
                     scale=(D ** 0.5) if scale_emb else 1.0)  # (B, L, D) f32

    # Masks are decomposed into a tiny additive key-pad vector (streamed) plus
    # an in-kernel causal mask (iota compare), i.e. no (B,Lq,Lk) f32 bias in
    # HBM. Assumes trg_mask == key_pad & subsequent, src_mask == key_pad (the
    # standard decoder construction, as in the reference driver).
    # TODO(synk): arbitrary dense masks would need streaming a full bias block.
    trg_pad_bias = _key_pad_bias(trg_mask)                   # (B, 1, L)
    src_pad_bias = _key_pad_bias(src_mask)                   # (B, 1, Ls)
    enc = enc_output.astype(jnp.float32)

    M = B * L
    for lp in params["layers"]:
        # masked self-attention (QKV + softmax + o-proj + residual + LN fused)
        x = fused_attention(x, None, lp["slf"], trg_pad_bias,
                            causal=True, d_k=d_k)
        # encoder-decoder attention
        x = fused_attention(x, enc, lp["enc"], src_pad_bias,
                            causal=False, d_k=d_k)
        # position-wise FFN (fully fused, d_inner-tiled)
        x = ffn(x.reshape(M, D), lp["ffn_w1"], lp["ffn_b1"], lp["ffn_w2"],
                lp["ffn_b2"], lp["ffn_ln_g"], lp["ffn_ln_b"]).reshape(B, L, D)
    return (x,)


def init_params(key, n_trg_vocab, d_word_vec, n_layers, n_head, d_k, d_v,
                d_model, d_inner, pad_idx, n_position=200):
    keys = jax.random.split(key, 256)
    it = iter(keys)

    def dense(shape, scale=0.02):
        return scale * jax.random.normal(next(it), shape, dtype=jnp.float32)

    emb = dense((n_trg_vocab, d_word_vec))
    emb = emb.at[pad_idx].set(0.0)                 # padding_idx row zeroed
    params = {
        "emb": emb,
        "pos_table": sinusoid_table(n_position, d_word_vec),
        "ln_g": jnp.ones((1, d_model), jnp.float32),
        "ln_b": jnp.zeros((1, d_model), jnp.float32),
        "layers": [],
    }

    def attn_params():
        # per-head weight layout (H, D, d): heads ride a grid axis in the
        # kernel, so q/k/v are never lane-sliced at d_k granularity.
        return {
            "wq": dense((n_head, d_model, d_k)).astype(jnp.bfloat16),
            "wk": dense((n_head, d_model, d_k)).astype(jnp.bfloat16),
            "wv": dense((n_head, d_model, d_v)).astype(jnp.bfloat16),
            "wo": dense((n_head, d_v, d_model)).astype(jnp.bfloat16),
            "ln_g": jnp.ones((1, d_model), jnp.float32),
            "ln_b": jnp.zeros((1, d_model), jnp.float32),
        }

    for _ in range(n_layers):
        params["layers"].append({
            "slf": attn_params(),
            "enc": attn_params(),
            "ffn_w1": dense((d_model, d_inner)).astype(jnp.bfloat16),
            "ffn_b1": jnp.zeros((1, d_inner), jnp.float32),
            "ffn_w2": dense((d_inner, d_model)).astype(jnp.bfloat16),
            "ffn_b2": jnp.zeros((1, d_model), jnp.float32),
            "ffn_ln_g": jnp.ones((1, d_model), jnp.float32),
            "ffn_ln_b": jnp.zeros((1, d_model), jnp.float32),
        })
    return params


if __name__ == "__main__":
    B, L, Ls = 2, 8, 8
    n_trg_vocab, d_model, d_inner = 50, 32, 64
    n_layers, n_head, d_k, d_v = 2, 4, 8, 8
    pad_idx = 0

    key = jax.random.PRNGKey(0)
    kp, kt, ke = jax.random.split(key, 3)
    params = init_params(kp, n_trg_vocab, d_model, n_layers, n_head, d_k, d_v,
                         d_model, d_inner, pad_idx)

    trg_seq = jax.random.randint(kt, (B, L), 1, n_trg_vocab, dtype=jnp.int32)
    enc_output = jax.random.normal(ke, (B, Ls, d_model), dtype=jnp.float32)

    # target mask = pad mask & causal (subsequent) mask; source mask = pad mask
    subsequent = jnp.tril(jnp.ones((1, L, L), jnp.bool_))
    trg_pad = (trg_seq != pad_idx)[:, None, :]
    trg_mask = trg_pad & subsequent                # (B, L, L)
    src_mask = jnp.ones((B, 1, Ls), jnp.bool_)     # (B, 1, Ls)

    (dec_out,) = decoder_forward(params, trg_seq, trg_mask, enc_output, src_mask,
                                 n_head=n_head, d_k=d_k, d_v=d_v, scale_emb=False)
    jax.block_until_ready(dec_out)
    assert dec_out.shape == (B, L, d_model) and dec_out.dtype == jnp.float32
    assert bool(jnp.all(jnp.isfinite(dec_out)))
    print("KERNEL_OK")
</pallas_src>

<mosaic_0001>
module attributes {stable_mosaic.version = 11 : i64} {
  func.func @_embed_ln_kernel(%arg0: i32, %arg1: memref<1x8x32xf32, #tpu.memory_space<vmem>>, %arg2: memref<1x8x32xf32, #tpu.memory_space<vmem>>, %arg3: memref<1x32xf32, #tpu.memory_space<vmem>>, %arg4: memref<1x32xf32, #tpu.memory_space<vmem>>, %arg5: memref<1x8x32xf32, #tpu.memory_space<vmem>>) attributes {dimension_semantics = [#tpu.dimension_semantics<parallel>], iteration_bounds = array<i64: 2>, scalar_prefetch = 0 : i64, scratch_operands = 0 : i64, tpu.core_type = #tpu.core_type<tc>, window_params = [{transform_indices = @transform_0, window_bounds = array<i64: 1, 8, 32>}, {pipeline_mode = #tpu.pipeline_mode<synchronous>, transform_indices = @transform_1, window_bounds = array<i64: 1, 8, 32>}, {pipeline_mode = #tpu.pipeline_mode<synchronous>, transform_indices = @transform_2, window_bounds = array<i64: 1, 32>}, {pipeline_mode = #tpu.pipeline_mode<synchronous>, transform_indices = @transform_3, window_bounds = array<i64: 1, 32>}, {transform_indices = @transform_4, window_bounds = array<i64: 1, 8, 32>}]} {
    %c0 = arith.constant 0 : index
    %c0_0 = arith.constant 0 : index
    %c0_1 = arith.constant 0 : index
    %0 = vector.load %arg1[%c0, %c0_0, %c0_1] : memref<1x8x32xf32, #tpu.memory_space<vmem>>, vector<1x8x32xf32>
    %1 = vector.shape_cast %0 : vector<1x8x32xf32> to vector<8x32xf32>
    %cst = arith.constant 1.000000e+00 : f32
    %2 = vector.broadcast %cst : f32 to vector<8x32xf32>
    %3 = arith.mulf %1, %2 : vector<8x32xf32>
    %c0_2 = arith.constant 0 : index
    %c0_3 = arith.constant 0 : index
    %c0_4 = arith.constant 0 : index
    %4 = vector.load %arg2[%c0_2, %c0_3, %c0_4] : memref<1x8x32xf32, #tpu.memory_space<vmem>>, vector<1x8x32xf32>
    %5 = vector.shape_cast %4 : vector<1x8x32xf32> to vector<8x32xf32>
    %6 = arith.addf %3, %5 : vector<8x32xf32>
    %c0_5 = arith.constant 0 : index
    %c0_6 = arith.constant 0 : index
    %7 = vector.load %arg3[%c0_5, %c0_6] : memref<1x32xf32, #tpu.memory_space<vmem>>, vector<1x32xf32>
    %c0_7 = arith.constant 0 : index
    %c0_8 = arith.constant 0 : index
    %8 = vector.load %arg4[%c0_7, %c0_8] : memref<1x32xf32, #tpu.memory_space<vmem>>, vector<1x32xf32>
    %cst_9 = arith.constant dense<0.000000e+00> : vector<8xf32>
    %9 = vector.multi_reduction <add>, %6, %cst_9 [1] : vector<8x32xf32> to vector<8xf32>
    %10 = vector.shape_cast %9 : vector<8xf32> to vector<8x1xf32>
    %cst_10 = arith.constant 3.200000e+01 : f32
    %11 = vector.broadcast %cst_10 : f32 to vector<8x1xf32>
    %12 = arith.divf %10, %11 : vector<8x1xf32>
    %13 = vector.broadcast %12 : vector<8x1xf32> to vector<8x32xf32>
    %14 = arith.subf %6, %13 : vector<8x32xf32>
    %15 = arith.mulf %14, %14 : vector<8x32xf32>
    %cst_11 = arith.constant dense<0.000000e+00> : vector<8xf32>
    %16 = vector.multi_reduction <add>, %15, %cst_11 [1] : vector<8x32xf32> to vector<8xf32>
    %17 = vector.shape_cast %16 : vector<8xf32> to vector<8x1xf32>
    %cst_12 = arith.constant 3.200000e+01 : f32
    %18 = vector.broadcast %cst_12 : f32 to vector<8x1xf32>
    %19 = arith.divf %17, %18 : vector<8x1xf32>
    %20 = vector.broadcast %12 : vector<8x1xf32> to vector<8x32xf32>
    %21 = arith.subf %6, %20 : vector<8x32xf32>
    %cst_13 = arith.constant 9.99999997E-7 : f32
    %22 = vector.broadcast %cst_13 : f32 to vector<8x1xf32>
    %23 = arith.addf %19, %22 : vector<8x1xf32>
    %24 = math.rsqrt %23 : vector<8x1xf32>
    %25 = vector.broadcast %24 : vector<8x1xf32> to vector<8x32xf32>
    %26 = arith.mulf %21, %25 : vector<8x32xf32>
    %27 = vector.broadcast %7 : vector<1x32xf32> to vector<8x32xf32>
    %28 = arith.mulf %26, %27 : vector<8x32xf32>
    %29 = vector.broadcast %8 : vector<1x32xf32> to vector<8x32xf32>
    %30 = arith.addf %28, %29 : vector<8x32xf32>
    %c0_14 = arith.constant 0 : index
    %c0_15 = arith.constant 0 : index
    %c0_16 = arith.constant 0 : index
    %31 = vector.load %arg5[%c0_14, %c0_15, %c0_16] : memref<1x8x32xf32, #tpu.memory_space<vmem>>, vector<1x8x32xf32>
    %32 = vector.shape_cast %31 : vector<1x8x32xf32> to vector<8x32xf32>
    %33 = vector.shape_cast %30 : vector<8x32xf32> to vector<1x8x32xf32>
    tpu.vector_store %arg5[%c0_14, %c0_15, %c0_16], %33 {strides = array<i32>} : memref<1x8x32xf32, #tpu.memory_space<vmem>>, vector<1x8x32xf32>,
    return
  }
  func.func @transform_0(%arg0: i32) -> (i32, i32, i32) {
    %c0_i32 = arith.constant 0 : i32
    %c0_i32_0 = arith.constant 0 : i32
    %c0_i32_1 = arith.constant 0 : i32
    return %arg0, %c0_i32, %c0_i32_0 : i32, i32, i32
  }
  func.func @transform_1(%arg0: i32) -> (i32, i32, i32) {
    %c0_i32 = arith.constant 0 : i32
    %c0_i32_0 = arith.constant 0 : i32
    %c0_i32_1 = arith.constant 0 : i32
    %c0_i32_2 = arith.constant 0 : i32
    return %c0_i32, %c0_i32_0, %c0_i32_1 : i32, i32, i32
  }
  func.func @transform_2(%arg0: i32) -> (i32, i32) {
    %c0_i32 = arith.constant 0 : i32
    %c0_i32_0 = arith.constant 0 : i32
    %c0_i32_1 = arith.constant 0 : i32
    return %c0_i32, %c0_i32_0 : i32, i32
  }
  func.func @transform_3(%arg0: i32) -> (i32, i32) {
    %c0_i32 = arith.constant 0 : i32
    %c0_i32_0 = arith.constant 0 : i32
    %c0_i32_1 = arith.constant 0 : i32
    return %c0_i32, %c0_i32_0 : i32, i32
  }
  func.func @transform_4(%arg0: i32) -> (i32, i32, i32) {
    %c0_i32 = arith.constant 0 : i32
    %c0_i32_0 = arith.constant 0 : i32
    %c0_i32_1 = arith.constant 0 : i32
    return %arg0, %c0_i32, %c0_i32_0 : i32, i32, i32
  }
}

</mosaic_0001>

<llo_original>
// kernel: tpu_custom_call.1
$region0: #{tpu_custom_call.1}
  #allocation0 [shape = 'u32[]', space=smem, size = 0x4, offset = 0x4, fixed_abs, tag = 'smem constant byte address 0x4 - core index']
  #allocation1 [shape = 'u32[144,128]{1,0:T(1,128)}', space=vmem, size = 0x12000, scoped, tag = 'internal scratch']
  %s0 = inlined_call_operand.hbm [shape: f32[2,8,32], index: 0, kind: input, shape index: {}]
  %s1 = inlined_call_operand.hbm [shape: f32[1,8,32], index: 1, kind: input, shape index: {}]
  %s2 = inlined_call_operand.vmem [shape: f32[1,32], index: 2, kind: input, shape index: {}]
  %s3 = inlined_call_operand.vmem [shape: f32[1,32], index: 3, kind: input, shape index: {}]
  %s4 = inlined_call_operand.hbm [shape: f32[2,8,32], index: 4, kind: output, shape index: {}]
  %s5 = sld [smem:[#allocation0]]
  $region57: #{tpu_custom_call.1} parent=0
    _
  %s7 = ssub.s32 1, %s5
  %s8 = scalar_select 0, %s7, %s5
  $region1: #{tpu_custom_call.1} parent=0
    #allocation2 [shape = 'u8[8192]{0}', space=vmem, size = 0x2000, scoped, tag = 'input window, operand 0']
    #allocation3 [shape = 's32[2]{0}', space=sflag, size = 0x8, scoped, tag = 'scoped memory for tpu_custom_call.1']
    #allocation4 [shape = 's32[2]{0}', space=sflag, size = 0x8, scoped, tag = 'scoped memory for tpu_custom_call.1']
    #allocation5 [shape = 'u8[4096]{0}', space=vmem, size = 0x1000, scoped, tag = 'input window, operand 1, single buffered']
    #allocation6 [shape = 's32[1]{0}', space=sflag, size = 0x4, scoped, tag = 'scoped memory for tpu_custom_call.1']
    #allocation7 [shape = 'u8[8192]{0}', space=vmem, size = 0x2000, scoped, tag = 'output window, operand 0']
    %9 = vsyncpa [#allocation3], 0
    %s10 = scalar_lea.sflag [#allocation3], 1
    %11 = vsyncpa %s10, 0
    %12 = vsyncpa [#allocation6], 0
    %13 = vsyncpa [#allocation4], 0
    %s14 = scalar_lea.sflag [#allocation4], 1
    %15 = vsyncpa %s14, 0
    loop: start=0, step=1, limit=4
    $region2: #{tpu_custom_call.1} parent=1 // loop_pre_header
      _
    $region3: #{tpu_custom_call.1} parent=1 // loop_header
      %s17 = sphi 0, %s21
      %p18 = scmp.ge.s32.totalorder %s17, 4
      %s27 = sphi 0, %s29
      %s30 = sphi 0, %s27
      %s31 = sphi 0, %s30
      %s47 = sphi 0, %s31
      %s51 = sphi 0, %s51
      %s53 = sphi 0, %s51
      %s54 = sphi 0, %s53
      %s68 = sphi 0, %s54
      %s72 = sphi 0, %s72
      %s74 = sphi 0, %s72
      %s75 = sphi 0, %s74
      %s89 = sphi 0, %s75
      %s93 = sphi 0, %s93
      %s95 = sphi 0, %s93
      %s96 = sphi 0, %s95
      %s110 = sphi 0, %s96
      %s116 = sphi 0, %s118
      %s119 = sphi 0, %s116
      %s120 = sphi 0, %s119
      %s136 = sphi 0, %s120
    $region4: #{tpu_custom_call.1} parent=1 // loop_header_branch
      %20 = sbr.rel (%p18) target = $region8
    $region5: #{tpu_custom_call.1} parent=1 // loop_body
      %s22 = ssub.s32 %s17, 1
      %s23 = ssub.s32 %s17, 2
      %s24 = sadd.s32 %s17, 1
      %s25 = ssub.s32 %s17, %s24
      %p26 = scmp.eq.s32.totalorder %s25, 0
      %s28 = sadd.s32 %s27, 1
      %s29 = scalar_select %p26, %s27, %s28
      %p32 = pneg %p26
      %p33 = scmp.eq.s32.totalorder %s17, 1
      %p34 = por %p32, %p33
      %p35 = scmp.ne.s32.totalorder %s27, %s30
      %p36 = scmp.eq.s32.totalorder %s17, 0
      %p37 = por %p35, %p36
      %p38 = scmp.ne.s32.totalorder %s27, %s30
      %p39 = scmp.eq.s32.totalorder %s22, 1
      %p40 = por %p38, %p39
      %p41 = scmp.ne.s32.totalorder %s30, %s31
      %p42 = scmp.eq.s32.totalorder %s22, 0
      %p43 = por %p41, %p42
      %p44 = scmp.ne.s32.totalorder %s30, %s31
      %p45 = scmp.eq.s32.totalorder %s23, 1
      %p46 = por %p44, %p45
      %p48 = scmp.ne.s32.totalorder %s31, %s47
      %p49 = scmp.eq.s32.totalorder %s23, 0
      %p50 = por %p48, %p49
      %s52 = sadd.s32 %s51, 1
      %p55 = scmp.eq.s32.totalorder %s17, 1
      %p56 = scmp.ne.s32.totalorder %s51, %s53
      %p57 = scmp.eq.s32.totalorder %s17, 0
      %p58 = por %p56, %p57
      %p59 = scmp.ne.s32.totalorder %s51, %s53
      %p60 = scmp.eq.s32.totalorder %s22, 1
      %p61 = por %p59, %p60
      %p62 = scmp.ne.s32.totalorder %s53, %s54
      %p63 = scmp.eq.s32.totalorder %s22, 0
      %p64 = por %p62, %p63
      %p65 = scmp.ne.s32.totalorder %s53, %s54
      %p66 = scmp.eq.s32.totalorder %s23, 1
      %p67 = por %p65, %p66
      %p69 = scmp.ne.s32.totalorder %s54, %s68
      %p70 = scmp.eq.s32.totalorder %s23, 0
      %p71 = por %p69, %p70
      %s73 = sadd.s32 %s72, 1
      %p76 = scmp.eq.s32.totalorder %s17, 1
      %p77 = scmp.ne.s32.totalorder %s72, %s74
      %p78 = scmp.eq.s32.totalorder %s17, 0
      %p79 = por %p77, %p78
      %p80 = scmp.ne.s32.totalorder %s72, %s74
      %p81 = scmp.eq.s32.totalorder %s22, 1
      %p82 = por %p80, %p81
      %p83 = scmp.ne.s32.totalorder %s74, %s75
      %p84 = scmp.eq.s32.totalorder %s22, 0
      %p85 = por %p83, %p84
      %p86 = scmp.ne.s32.totalorder %s74, %s75
      %p87 = scmp.eq.s32.totalorder %s23, 1
      %p88 = por %p86, %p87
      %p90 = scmp.ne.s32.totalorder %s75, %s89
      %p91 = scmp.eq.s32.totalorder %s23, 0
      %p92 = por %p90, %p91
      %s94 = sadd.s32 %s93, 1
      %p97 = scmp.eq.s32.totalorder %s17, 1
      %p98 = scmp.ne.s32.totalorder %s93, %s95
      %p99 = scmp.eq.s32.totalorder %s17, 0
      %p100 = por %p98, %p99
      %p101 = scmp.ne.s32.totalorder %s93, %s95
      %p102 = scmp.eq.s32.totalorder %s22, 1
      %p103 = por %p101, %p102
      %p104 = scmp.ne.s32.totalorder %s95, %s96
      %p105 = scmp.eq.s32.totalorder %s22, 0
      %p106 = por %p104, %p105
      %p107 = scmp.ne.s32.totalorder %s95, %s96
      %p108 = scmp.eq.s32.totalorder %s23, 1
      %p109 = por %p107, %p108
      %p111 = scmp.ne.s32.totalorder %s96, %s110
      %p112 = scmp.eq.s32.totalorder %s23, 0
      %p113 = por %p111, %p112
      %s114 = ssub.s32 %s17, %s24
      %p115 = scmp.eq.s32.totalorder %s114, 0
      %s117 = sadd.s32 %s116, 1
      %s118 = scalar_select %p115, %s116, %s117
      %p121 = pneg %p115
      %p122 = scmp.eq.s32.totalorder %s17, 1
      %p123 = por %p121, %p122
      %p124 = scmp.ne.s32.totalorder %s116, %s119
      %p125 = scmp.eq.s32.totalorder %s17, 0
      %p126 = por %p124, %p125
      %p127 = scmp.ne.s32.totalorder %s116, %s119
      %p128 = scmp.eq.s32.totalorder %s22, 1
      %p129 = por %p127, %p128
      %p130 = scmp.ne.s32.totalorder %s119, %s120
      %p131 = scmp.eq.s32.totalorder %s22, 0
      %p132 = por %p130, %p131
      %p133 = scmp.ne.s32.totalorder %s119, %s120
      %p134 = scmp.eq.s32.totalorder %s23, 1
      %p135 = por %p133, %p134
      %p137 = scmp.ne.s32.totalorder %s120, %s136
      %p138 = scmp.eq.s32.totalorder %s23, 0
      %p139 = por %p137, %p138
      %p140 = scmp.le.s32.totalorder 1, %s17
      %p141 = scmp.lt.s32.totalorder %s17, 3
      %p142 = pnand %p140, %p141
      %p143 = pneg %p142
      // Predicated region
      $region9: #{tpu_custom_call.1} parent=5 // pred_check
        _
      $region10: #{tpu_custom_call.1} parent=5 // pred_check_branch
        %145 = sbr.rel (%p142) target = $region12
      $region11: #{tpu_custom_call.1} parent=5 // pred_region
        %s146 = ssub.s32 %s17, 1
        // Predicated region
        $region13: #{tpu_custom_call.1} parent=11 // pred_check
          %p147 = pneg %p64
        $region14: #{tpu_custom_call.1} parent=11 // pred_check_branch
          %149 = sbr.rel (%p147) target = $region16
        $region15: #{tpu_custom_call.1} parent=11 // pred_region
          %s151 = ssub.s32 128, 128
          %152 = vsyncadd [#allocation6], %s151
          %s154 = sshll.u32 [#allocation5], 4
          %s155 = int_to_ptr.vmem [resolvable:$true] %s154
          %157 = dma.hbm_to_vmem [thread:$0]  %s1, 128, %s155, [#allocation6]
        $region16: #{tpu_custom_call.1} parent=11 // pred_fallthru
          _
        // Predicated region
        $region17: #{tpu_custom_call.1} parent=11 // pred_check
          %p158 = pneg %p85
        $region18: #{tpu_custom_call.1} parent=11 // pred_check_branch
          %160 = sbr.rel (%p158) target = $region20
        $region19: #{tpu_custom_call.1} parent=11 // pred_region
          _
        $region20: #{tpu_custom_call.1} parent=11 // pred_fallthru
          _
        // Predicated region
        $region21: #{tpu_custom_call.1} parent=11 // pred_check
          %p161 = pneg %p106
        $region22: #{tpu_custom_call.1} parent=11 // pred_check_branch
          %163 = sbr.rel (%p161) target = $region24
        $region23: #{tpu_custom_call.1} parent=11 // pred_region
          _
        $region24: #{tpu_custom_call.1} parent=11 // pred_fallthru
          _
      $region12: #{tpu_custom_call.1} parent=5 // pred_fallthru
        _
      %p164 = scmp.lt.s32.totalorder %s17, 2
      // Predicated region
      $region25: #{tpu_custom_call.1} parent=5 // pred_check
        %p165 = pneg %p164
      $region26: #{tpu_custom_call.1} parent=5 // pred_check_branch
        %167 = sbr.rel (%p165) target = $region28
      $region27: #{tpu_custom_call.1} parent=5 // pred_region
        // Predicated region
        $region29: #{tpu_custom_call.1} parent=27 // pred_check
          %p168 = pneg %p37
        $region30: #{tpu_custom_call.1} parent=27 // pred_check_branch
          %170 = sbr.rel (%p168) target = $region32
        $region31: #{tpu_custom_call.1} parent=27 // pred_region
          %s171 = sand.u32 %s27, 1
          %s172 = scalar_lea.sflag [#allocation3], %s171
          %s173 = sand.u32 %s27, 1
          %s174 = smul.addr %s173, 8
          %s175 = scalar_lea.vmem [#allocation2], %s174
          %s177 = ssub.s32 128, 128
          %178 = vsyncadd %s172, %s177
          %s179 = smul.addr %s17, 128
          %s180 = scalar_lea.hbm %s0, %s179
          %s182 = sshll.u32 %s175, 4
          %s183 = int_to_ptr.vmem [resolvable:$true] %s182
          %185 = dma.hbm_to_vmem [thread:$0]  %s180, 128, %s183, %s172
        $region32: #{tpu_custom_call.1} parent=27 // pred_fallthru
          _
      $region28: #{tpu_custom_call.1} parent=5 // pred_fallthru
        _
      %p186 = scmp.le.s32.totalorder 1, %s17
      %p187 = scmp.lt.s32.totalorder %s17, 3
      %p188 = pnand %p186, %p187
      %p189 = pneg %p188
      // Predicated region
      $region33: #{tpu_custom_call.1} parent=5 // pred_check
        _
      $region34: #{tpu_custom_call.1} parent=5 // pred_check_branch
        %191 = sbr.rel (%p188) target = $region36
      $region35: #{tpu_custom_call.1} parent=5 // pred_region
        %s192 = ssub.s32 %s17, 1
        %s193 = sand.u32 %s30, 1
        %s194 = scalar_lea.sflag [#allocation3], %s193
        %s195 = sand.u32 %s30, 1
        %s196 = smul.addr %s195, 8
        %s197 = scalar_lea.vmem [#allocation2], %s196
        // Predicated region
        $region37: #{tpu_custom_call.1} parent=35 // pred_check
          %p198 = pneg %p43
        $region38: #{tpu_custom_call.1} parent=35 // pred_check_branch
          %200 = sbr.rel (%p198) target = $region40
        $region39: #{tpu_custom_call.1} parent=35 // pred_region
          %201 = dma.done %s194, 128
        $region40: #{tpu_custom_call.1} parent=35 // pred_fallthru
          _
        // Predicated region
        $region41: #{tpu_custom_call.1} parent=35 // pred_check
          %p202 = pneg %p64
        $region42: #{tpu_custom_call.1} parent=35 // pred_check_branch
          %204 = sbr.rel (%p202) target = $region44
        $region43: #{tpu_custom_call.1} parent=35 // pred_region
          %205 = dma.done [#allocation6], 128
        $region44: #{tpu_custom_call.1} parent=35 // pred_fallthru
          _
        %s206 = sand.u32 %s30, 1
        %s207 = scalar_lea.sflag [#allocation3], %s206
        %s208 = sand.u32 %s30, 1
        %s209 = smul.addr %s208, 8
        %s210 = scalar_lea.vmem [#allocation2], %s209
        %p211 = pneg %p43
        %p212 = pneg %p40
        %p213 = pneg %p64
        %p214 = pneg %p61
        %p215 = pneg %p85
        %p216 = pneg %p82
        %p217 = pneg %p106
        %p218 = pneg %p103
        %p219 = pneg %p132
        %p220 = pneg %p129
        %s221 = sand.u32 %s119, 1
        %s222 = scalar_lea.sflag [#allocation4], %s221
        %s223 = sand.u32 %s119, 1
        %s224 = smul.addr %s223, 8
        %s225 = scalar_lea.vmem [#allocation7], %s224
        %v226 = vld [vmem:[%s197] sm:$0xff]
        %v227 = vld [vmem:[#allocation5] sm:$0xff]
        %v228 = vadd.f32 %v226, %v227
        %v229 = vld [vmem:[%s2] sm:$0x1]
        %v230 = vld [vmem:[%s3] sm:$0x1]
        %vm231 = vcmask 261120
        %v232 = vsel %vm231, %v228, 0.0
        %233 = vadd.xlane.f32.xlu0 %v232
        %v234 = vpop.xlane.xlu0 %233
        %v235 = vrcp.pop 32.0
        %v236 = vmul.f32 %v234, %v235
        %v237 = vsub.f32 %v228, %v236
        %v238 = vmul.f32 %v237, %v237
        %v239 = vsel %vm231, %v238, 0.0
        %240 = vadd.xlane.f32.xlu0 %v239
        %v241 = vpop.xlane.xlu0 %240
        %v242 = vmul.f32 %v241, %v235
        %v243 = vadd.f32 %v242, 1e-06
        %v244 = vrsqrt.pop %v243
        %v245 = vmul.f32 %v237, %v244
        %v247 = vlaneseq
        %v248 = vshrl.u32 %v247, 7
        %v249 = vsub.s32 0, %v248
        %v250 = vrot.slane %v229, %v249
        %v252 = vmul.f32 %v245, %v250
        %v254 = vlaneseq
        %v255 = vshrl.u32 %v254, 7
        %v256 = vsub.s32 0, %v255
        %v257 = vrot.slane %v230, %v256
        %v259 = vadd.f32 %v252, %v257
        %260 = vst.msk [vmem:[%s225] sm:$0xff] %vm231, %v259
        %s261 = sand.u32 %s119, 1
        %s262 = scalar_lea.sflag [#allocation4], %s261
        %s263 = sand.u32 %s119, 1
        %s264 = smul.addr %s263, 8
        %s265 = scalar_lea.vmem [#allocation7], %s264
        // Predicated region
        $region45: #{tpu_custom_call.1} parent=35 // pred_check
          %p266 = pneg %p129
        $region46: #{tpu_custom_call.1} parent=35 // pred_check_branch
          %268 = sbr.rel (%p266) target = $region48
        $region47: #{tpu_custom_call.1} parent=35 // pred_region
          %s270 = ssub.s32 128, 128
          %271 = vsyncadd %s262, %s270
          %s272 = smul.addr %s22, 128
          %s273 = scalar_lea.hbm %s4, %s272
          %s275 = sshll.u32 %s265, 4
          %s276 = int_to_ptr.vmem [resolvable:$true] %s275
          %278 = dma.vmem_to_hbm [thread:$0]  %s276, 128, %s273, %s262
        $region48: #{tpu_custom_call.1} parent=35 // pred_fallthru
          _
      $region36: #{tpu_custom_call.1} parent=5 // pred_fallthru
        _
      %p279 = scmp.le.s32.totalorder 2, %s17
      // Predicated region
      $region49: #{tpu_custom_call.1} parent=5 // pred_check
        %p280 = pneg %p279
      $region50: #{tpu_custom_call.1} parent=5 // pred_check_branch
        %282 = sbr.rel (%p280) target = $region52
      $region51: #{tpu_custom_call.1} parent=5 // pred_region
        %s283 = ssub.s32 %s17, 2
        // Predicated region
        $region53: #{tpu_custom_call.1} parent=51 // pred_check
          %p284 = pneg %p135
        $region54: #{tpu_custom_call.1} parent=51 // pred_check_branch
          %286 = sbr.rel (%p284) target = $region56
        $region55: #{tpu_custom_call.1} parent=51 // pred_region
          %s287 = sand.u32 %s120, 1
          %s288 = scalar_lea.sflag [#allocation4], %s287
          %s289 = sand.u32 %s120, 1
          %s290 = smul.addr %s289, 8
          %s291 = scalar_lea.vmem [#allocation7], %s290
          %292 = dma.done %s288, 128
        $region56: #{tpu_custom_call.1} parent=51 // pred_fallthru
          _
      $region52: #{tpu_custom_call.1} parent=5 // pred_fallthru
        _
    $region6: #{tpu_custom_call.1} parent=1 // loop_footer
      %s21 = sadd.s32 1, %s17
    $region7: #{tpu_custom_call.1} parent=1 // loop_footer_branch
      %16 = sbr.rel target = $region3
    $region8: #{tpu_custom_call.1} parent=1 // loop_exit
      _
    %293 = vsyncpa [#allocation3], 1
    %s294 = scalar_lea.sflag [#allocation3], 1
    %295 = vsyncpa %s294, 1
    %296 = vsyncpa [#allocation6], 1
    %297 = vsyncpa [#allocation4], 1
    %s298 = scalar_lea.sflag [#allocation4], 1
    %299 = vsyncpa %s298, 1

</llo_original>
